<compile_context>
chip_gen: v5e
topology: v5e:2x2
jax: 0.10.0
libtpu: 0.0.40
codegen_flags: <defaults>
</compile_context>

<pallas_src>
import functools

import jax
import jax.numpy as jnp
from jax.experimental import pallas as pl
from jax.experimental.pallas import tpu as pltpu


def _codebook_kernel(idx_ref, table_ref, out_ref, *, normalize):
    # idx_ref  : (ROWS, 1) int32   -- indices for this tile of output rows (sublane-major)
    # table_ref: (E, D)    float   -- full embedding table, resident in VMEM
    # out_ref  : (ROWS, D) float
    idx = idx_ref[...]                     # (ROWS, 1)
    table = table_ref[...]                 # (E, D)
    rows_n = idx.shape[0]
    num_e = table.shape[0]

    # Gather ROWS rows via a one-hot matmul on the MXU.  idx is on sublanes,
    # so the compare against a lane-iota is a cheap lane broadcast.
    iota_e = jax.lax.broadcasted_iota(jnp.int32, (rows_n, num_e), 1)
    onehot = (idx == iota_e).astype(table.dtype)                   # (ROWS, E)
    gathered = jnp.dot(
        onehot, table,
        preferred_element_type=jnp.float32,
        precision=jax.lax.Precision.HIGHEST,                       # exact row copies
    )                                                              # (ROWS, D)

    if normalize:
        # torch F.normalize(x, dim=-1): x / max(||x||_2, 1e-12)
        #   == x * rsqrt(max(||x||^2, 1e-24))   (1e-24 representable in f32)
        sq = jnp.sum(gathered * gathered, axis=-1, keepdims=True)
        gathered = gathered * jax.lax.rsqrt(jnp.maximum(sq, jnp.float32(1e-24)))

    out_ref[...] = gathered.astype(out_ref.dtype)


def _round_up(x, m):
    return (x + m - 1) // m * m


def _choose_rows(n, block_rows):
    """Pick the per-step row-tile size.

    Prefers a multiple of 8 that divides n exactly (no padding -> no
    post-kernel slice / extra HBM traffic) while staying close to block_rows,
    and keeps the grid >= 2 steps when n allows it (v7x 2-TC sharding).
    """
    upper = min(block_rows, _round_up(n, 8))
    if n >= 16:
        upper = min(upper, _round_up((n + 1) // 2, 8))
    upper = max(8, (upper // 8) * 8)
    r = upper
    while r >= max(8, upper // 2):      # only accept divisors within 2x of max tile
        if n % r == 0:
            return r
        r -= 8
    return upper                         # fall back to padded tiles


def _table_spec(num_e, dim):
    """Full-table BlockSpec; constant block index -> single-buffer when supported."""
    idx_map = lambda i: (0, 0)
    try:
        return pl.BlockSpec((num_e, dim), idx_map, pipeline_mode=pl.Buffered(1))
    except (TypeError, AttributeError):
        return pl.BlockSpec((num_e, dim), idx_map)


def codebook_forward(idx, table, *, normalize_emb=True, block_rows=1024,
                     out_dtype=None):
    """Pallas equivalent of Codebook.forward.

    idx:   int array [B, T]
    table: float32 [num_embeddings, D]
    returns [B, T, D] in `out_dtype` (default: table dtype).  On v6e, passing
    out_dtype=jnp.bfloat16 halves the HBM write traffic if downstream allows.
    """
    B, T = idx.shape
    E, D = table.shape
    N = B * T
    out_dtype = table.dtype if out_dtype is None else out_dtype
    elt = jnp.dtype(out_dtype).itemsize
    tbl_elt = jnp.dtype(table.dtype).itemsize

    rows = _choose_rows(N, block_rows)
    n_pad = _round_up(N, rows)
    n_tiles = n_pad // rows

    idx_flat = idx.reshape(N).astype(jnp.int32)
    if n_pad != N:
        # Pad with index 0 (always valid); padded rows are sliced off below.
        idx_flat = jnp.pad(idx_flat, (0, n_pad - N))
    idx_2d = idx_flat.reshape(n_pad, 1)          # sublane-major index layout

    kernel = functools.partial(_codebook_kernel, normalize=normalize_emb)

    # VMEM budget: table (x2 in case single-buffering is unavailable) +
    # double-buffered output tile + double-buffered idx tile + headroom.
    vmem_need = 2 * E * D * tbl_elt + 2 * rows * D * elt + 2 * rows * 4
    vmem_limit = min(max(int(vmem_need * 1.5) + (4 << 20), 32 << 20), 48 << 20)

    cost = pl.CostEstimate(
        flops=2 * n_pad * E * D,
        transcendentals=n_pad if normalize_emb else 0,
        bytes_accessed=n_pad * D * elt + E * D * tbl_elt + n_pad * 4,
    )

    out_flat = pl.pallas_call(
        kernel,
        out_shape=jax.ShapeDtypeStruct((n_pad, D), out_dtype),
        grid_spec=pltpu.PrefetchScalarGridSpec(
            num_scalar_prefetch=0,
            grid=(n_tiles,),
            in_specs=[
                # Per-step index tile, indices on sublanes.
                pl.BlockSpec((rows, 1), lambda i: (i, 0)),
                # Full table, resident (constant block -> single DMA, 1 buffer).
                _table_spec(E, D),
            ],
            out_specs=pl.BlockSpec((rows, D), lambda i: (i, 0)),
        ),
        compiler_params=pltpu.CompilerParams(
            dimension_semantics=("parallel",),
            vmem_limit_bytes=vmem_limit,
        ),
        cost_estimate=cost,
    )(idx_2d, table)

    if n_pad != N:
        out_flat = out_flat[:N]
    return out_flat.reshape(B, T, D)


if __name__ == "__main__":
    # Deterministic synthetic parameters (nn.Embedding init ~ N(0, 1)).
    num_embeddings = 64
    embedding_dim = 128
    normalize_emb = True

    key = jax.random.PRNGKey(0)
    k_table, k_idx = jax.random.split(key)
    table = jax.random.normal(k_table, (num_embeddings, embedding_dim),
                              dtype=jnp.float32)

    B, T = 2, 8
    idx = jax.random.randint(k_idx, (B, T), 0, num_embeddings, dtype=jnp.int32)

    out = codebook_forward(idx, table, normalize_emb=normalize_emb)
    out = jax.block_until_ready(out)

    # Pure-JAX reference check.
    ref = table[idx]
    if normalize_emb:
        denom = jnp.maximum(
            jnp.sqrt(jnp.sum(ref * ref, axis=-1, keepdims=True)), 1e-12)
        ref = ref / denom
    assert out.shape == (B, T, embedding_dim)
    assert jnp.allclose(out, ref, atol=1e-5, rtol=1e-5)

    print("KERNEL_OK")
</pallas_src>

<mosaic_0001>
module attributes {stable_mosaic.version = 11 : i64} {
  func.func @_codebook_kernel(%arg0: i32, %arg1: memref<8x1xi32, #tpu.memory_space<vmem>>, %arg2: memref<64x128xf32, #tpu.memory_space<vmem>>, %arg3: memref<8x128xf32, #tpu.memory_space<vmem>>) attributes {dimension_semantics = [#tpu.dimension_semantics<parallel>], iteration_bounds = array<i64: 2>, scalar_prefetch = 0 : i64, scratch_operands = 0 : i64, tpu.core_type = #tpu.core_type<tc>, window_params = [{transform_indices = @transform_0, window_bounds = array<i64: 8, 1>}, {pipeline_mode = #tpu.pipeline_mode<synchronous>, transform_indices = @transform_1, window_bounds = array<i64: 64, 128>}, {transform_indices = @transform_2, window_bounds = array<i64: 8, 128>}]} {
    %c0 = arith.constant 0 : index
    %c0_0 = arith.constant 0 : index
    %0 = vector.load %arg1[%c0, %c0_0] : memref<8x1xi32, #tpu.memory_space<vmem>>, vector<8x1xi32>
    %c0_1 = arith.constant 0 : index
    %c0_2 = arith.constant 0 : index
    %1 = vector.load %arg2[%c0_1, %c0_2] : memref<64x128xf32, #tpu.memory_space<vmem>>, vector<64x128xf32>
    %2 = tpu.iota {dimensions = array<i32: 1>} : vector<8x64xi32>
    %3 = vector.broadcast %0 : vector<8x1xi32> to vector<8x64xi32>
    %4 = arith.cmpi eq, %3, %2 : vector<8x64xi32>
    %5 = arith.extui %4 : vector<8x64xi1> to vector<8x64xi32>
    %6 = arith.sitofp %5 : vector<8x64xi32> to vector<8x64xf32>
    %cst = arith.constant dense<0.000000e+00> : vector<8x128xf32>
    %7 = tpu.matmul %6, %1, %cst {dimension_numbers = #tpu.dot_dimension_numbers<[1], [0], [0], [1], [0, 0, 1, 1], [], []>, precision = #tpu.contract_precision<fp32>} : vector<8x64xf32>, vector<64x128xf32>, vector<8x128xf32> -> vector<8x128xf32>
    %8 = arith.mulf %7, %7 : vector<8x128xf32>
    %cst_3 = arith.constant dense<0.000000e+00> : vector<8xf32>
    %9 = vector.multi_reduction <add>, %8, %cst_3 [1] : vector<8x128xf32> to vector<8xf32>
    %10 = vector.shape_cast %9 : vector<8xf32> to vector<8x1xf32>
    %cst_4 = arith.constant 1.000000e-24 : f32
    %11 = vector.broadcast %cst_4 : f32 to vector<8x1xf32>
    %12 = arith.maximumf %10, %11 : vector<8x1xf32>
    %13 = math.rsqrt %12 : vector<8x1xf32>
    %14 = vector.broadcast %13 : vector<8x1xf32> to vector<8x128xf32>
    %15 = arith.mulf %7, %14 : vector<8x128xf32>
    %c0_5 = arith.constant 0 : index
    %c0_6 = arith.constant 0 : index
    %16 = vector.load %arg3[%c0_5, %c0_6] : memref<8x128xf32, #tpu.memory_space<vmem>>, vector<8x128xf32>
    tpu.vector_store %arg3[%c0_5, %c0_6], %15 {strides = array<i32>} : memref<8x128xf32, #tpu.memory_space<vmem>>, vector<8x128xf32>,
    return
  }
  func.func @transform_0(%arg0: i32) -> (i32, i32) {
    %c0_i32 = arith.constant 0 : i32
    %c0_i32_0 = arith.constant 0 : i32
    return %arg0, %c0_i32 : i32, i32
  }
  func.func @transform_1(%arg0: i32) -> (i32, i32) {
    %c0_i32 = arith.constant 0 : i32
    %c0_i32_0 = arith.constant 0 : i32
    %c0_i32_1 = arith.constant 0 : i32
    return %c0_i32, %c0_i32_0 : i32, i32
  }
  func.func @transform_2(%arg0: i32) -> (i32, i32) {
    %c0_i32 = arith.constant 0 : i32
    %c0_i32_0 = arith.constant 0 : i32
    return %arg0, %c0_i32 : i32, i32
  }
}

</mosaic_0001>

<llo_original>
// kernel: tpu_custom_call.1
$region0: #{tpu_custom_call.1}
  #allocation0 [shape = 'u32[]', space=smem, size = 0x4, offset = 0x4, fixed_abs, tag = 'smem constant byte address 0x4 - core index']
  #allocation1 [shape = 'u32[72,128]{1,0:T(1,128)}', space=vmem, size = 0x9000, scoped, tag = 'internal scratch']
  %s0 = inlined_call_operand.vmem [shape: s32[16,1], index: 0, kind: input, shape index: {}]
  %s1 = inlined_call_operand.hbm [shape: f32[64,128], index: 1, kind: input, shape index: {}]
  %s2 = inlined_call_operand.hbm [shape: f32[16,128], index: 2, kind: output, shape index: {}]
  %s3 = sld [smem:[#allocation0]]
  $region45: #{tpu_custom_call.1} parent=0
    _
  %s5 = ssub.s32 1, %s3
  %s6 = scalar_select 0, %s5, %s3
  $region1: #{tpu_custom_call.1} parent=0
    #allocation2 [shape = 'u8[32768]{0}', space=vmem, size = 0x8000, scoped, tag = 'input window, operand 1, single buffered']
    #allocation3 [shape = 's32[2]{0}', space=sflag, size = 0x8, scoped, tag = 'scoped memory for tpu_custom_call.1']
    #allocation4 [shape = 's32[2]{0}', space=sflag, size = 0x8, scoped, tag = 'scoped memory for tpu_custom_call.1']
    #allocation5 [shape = 'u8[8192]{0}', space=vmem, size = 0x2000, scoped, tag = 'output window, operand 0']
    %7 = vsyncpa [#allocation3], 0
    %8 = vsyncpa [#allocation4], 0
    %s9 = scalar_lea.sflag [#allocation4], 1
    %10 = vsyncpa %s9, 0
    loop: start=0, step=1, limit=4
    $region2: #{tpu_custom_call.1} parent=1 // loop_pre_header
      _
    $region3: #{tpu_custom_call.1} parent=1 // loop_header
      %s12 = sphi 0, %s16
      %p13 = scmp.ge.s32.totalorder %s12, 4
      %s22 = sphi 0, %s24
      %s25 = sphi 0, %s22
      %s26 = sphi 0, %s25
      %s42 = sphi 0, %s26
      %s46 = sphi 0, %s46
      %s48 = sphi 0, %s46
      %s49 = sphi 0, %s48
      %s63 = sphi 0, %s49
      %s69 = sphi 0, %s71
      %s72 = sphi 0, %s69
      %s73 = sphi 0, %s72
      %s89 = sphi 0, %s73
    $region4: #{tpu_custom_call.1} parent=1 // loop_header_branch
      %15 = sbr.rel (%p13) target = $region8
    $region5: #{tpu_custom_call.1} parent=1 // loop_body
      %s17 = ssub.s32 %s12, 1
      %s18 = ssub.s32 %s12, 2
      %s19 = sadd.s32 %s12, 1
      %s20 = ssub.s32 %s12, %s19
      %p21 = scmp.eq.s32.totalorder %s20, 0
      %s23 = sadd.s32 %s22, 1
      %s24 = scalar_select %p21, %s22, %s23
      %p27 = pneg %p21
      %p28 = scmp.eq.s32.totalorder %s12, 1
      %p29 = por %p27, %p28
      %p30 = scmp.ne.s32.totalorder %s22, %s25
      %p31 = scmp.eq.s32.totalorder %s12, 0
      %p32 = por %p30, %p31
      %p33 = scmp.ne.s32.totalorder %s22, %s25
      %p34 = scmp.eq.s32.totalorder %s17, 1
      %p35 = por %p33, %p34
      %p36 = scmp.ne.s32.totalorder %s25, %s26
      %p37 = scmp.eq.s32.totalorder %s17, 0
      %p38 = por %p36, %p37
      %p39 = scmp.ne.s32.totalorder %s25, %s26
      %p40 = scmp.eq.s32.totalorder %s18, 1
      %p41 = por %p39, %p40
      %p43 = scmp.ne.s32.totalorder %s26, %s42
      %p44 = scmp.eq.s32.totalorder %s18, 0
      %p45 = por %p43, %p44
      %s47 = sadd.s32 %s46, 1
      %p50 = scmp.eq.s32.totalorder %s12, 1
      %p51 = scmp.ne.s32.totalorder %s46, %s48
      %p52 = scmp.eq.s32.totalorder %s12, 0
      %p53 = por %p51, %p52
      %p54 = scmp.ne.s32.totalorder %s46, %s48
      %p55 = scmp.eq.s32.totalorder %s17, 1
      %p56 = por %p54, %p55
      %p57 = scmp.ne.s32.totalorder %s48, %s49
      %p58 = scmp.eq.s32.totalorder %s17, 0
      %p59 = por %p57, %p58
      %p60 = scmp.ne.s32.totalorder %s48, %s49
      %p61 = scmp.eq.s32.totalorder %s18, 1
      %p62 = por %p60, %p61
      %p64 = scmp.ne.s32.totalorder %s49, %s63
      %p65 = scmp.eq.s32.totalorder %s18, 0
      %p66 = por %p64, %p65
      %s67 = ssub.s32 %s12, %s19
      %p68 = scmp.eq.s32.totalorder %s67, 0
      %s70 = sadd.s32 %s69, 1
      %s71 = scalar_select %p68, %s69, %s70
      %p74 = pneg %p68
      %p75 = scmp.eq.s32.totalorder %s12, 1
      %p76 = por %p74, %p75
      %p77 = scmp.ne.s32.totalorder %s69, %s72
      %p78 = scmp.eq.s32.totalorder %s12, 0
      %p79 = por %p77, %p78
      %p80 = scmp.ne.s32.totalorder %s69, %s72
      %p81 = scmp.eq.s32.totalorder %s17, 1
      %p82 = por %p80, %p81
      %p83 = scmp.ne.s32.totalorder %s72, %s73
      %p84 = scmp.eq.s32.totalorder %s17, 0
      %p85 = por %p83, %p84
      %p86 = scmp.ne.s32.totalorder %s72, %s73
      %p87 = scmp.eq.s32.totalorder %s18, 1
      %p88 = por %p86, %p87
      %p90 = scmp.ne.s32.totalorder %s73, %s89
      %p91 = scmp.eq.s32.totalorder %s18, 0
      %p92 = por %p90, %p91
      %p93 = scmp.le.s32.totalorder 1, %s12
      %p94 = scmp.lt.s32.totalorder %s12, 3
      %p95 = pnand %p93, %p94
      %p96 = pneg %p95
      // Predicated region
      $region9: #{tpu_custom_call.1} parent=5 // pred_check
        _
      $region10: #{tpu_custom_call.1} parent=5 // pred_check_branch
        %98 = sbr.rel (%p95) target = $region12
      $region11: #{tpu_custom_call.1} parent=5 // pred_region
        %s99 = ssub.s32 %s12, 1
        // Predicated region
        $region13: #{tpu_custom_call.1} parent=11 // pred_check
          %p100 = pneg %p59
        $region14: #{tpu_custom_call.1} parent=11 // pred_check_branch
          %102 = sbr.rel (%p100) target = $region16
        $region15: #{tpu_custom_call.1} parent=11 // pred_region
          %104 = vsyncadd [#allocation3], 0
          %s105 = sshll.u32 %s1, 4
          %s106 = int_to_ptr.hbm [resolvable:$true] %s105
          %s107 = sshll.u32 [#allocation2], 4
          %s108 = int_to_ptr.vmem [resolvable:$true] %s107
          %113 = dma.hbm_to_vmem [thread:$0]  %s106, 1024, %s108, [#allocation3], 128, 128, 8
        $region16: #{tpu_custom_call.1} parent=11 // pred_fallthru
          _
      $region12: #{tpu_custom_call.1} parent=5 // pred_fallthru
        _
      %p114 = scmp.lt.s32.totalorder %s12, 2
      // Predicated region
      $region17: #{tpu_custom_call.1} parent=5 // pred_check
        %p115 = pneg %p114
      $region18: #{tpu_custom_call.1} parent=5 // pred_check_branch
        %117 = sbr.rel (%p115) target = $region20
      $region19: #{tpu_custom_call.1} parent=5 // pred_region
        // Predicated region
        $region21: #{tpu_custom_call.1} parent=19 // pred_check
          %p118 = pneg %p32
        $region22: #{tpu_custom_call.1} parent=19 // pred_check_branch
          %120 = sbr.rel (%p118) target = $region24
        $region23: #{tpu_custom_call.1} parent=19 // pred_region
          %p121 = scmp.lt.s32.totalorder %s12, 1
          %s122 = scalar_select %p121, %s12, 1
          %s123 = smul.addr %s122, 8
          %s124 = scalar_lea.vmem %s0, %s123
        $region24: #{tpu_custom_call.1} parent=19 // pred_fallthru
          _
      $region20: #{tpu_custom_call.1} parent=5 // pred_fallthru
        _
      %p125 = scmp.le.s32.totalorder 1, %s12
      %p126 = scmp.lt.s32.totalorder %s12, 3
      %p127 = pnand %p125, %p126
      %p128 = pneg %p127
      // Predicated region
      $region25: #{tpu_custom_call.1} parent=5 // pred_check
        _
      $region26: #{tpu_custom_call.1} parent=5 // pred_check_branch
        %130 = sbr.rel (%p127) target = $region28
      $region27: #{tpu_custom_call.1} parent=5 // pred_region
        %s131 = ssub.s32 %s12, 1
        // Predicated region
        $region29: #{tpu_custom_call.1} parent=27 // pred_check
          %p132 = pneg %p59
        $region30: #{tpu_custom_call.1} parent=27 // pred_check_branch
          %134 = sbr.rel (%p132) target = $region32
        $region31: #{tpu_custom_call.1} parent=27 // pred_region
          %136 = dma.done [#allocation3], 1024
        $region32: #{tpu_custom_call.1} parent=27 // pred_fallthru
          _
        %p137 = scmp.lt.s32.totalorder %s17, 1
        %s138 = scalar_select %p137, %s17, 1
        %s139 = smul.addr %s138, 8
        %s140 = scalar_lea.vmem %s0, %s139
        %p141 = pneg %p38
        %p142 = pneg %p35
        %p143 = pneg %p59
        %p144 = pneg %p56
        %p145 = pneg %p85
        %p146 = pneg %p82
        %s147 = sand.u32 %s72, 1
        %s148 = scalar_lea.sflag [#allocation4], %s147
        %s149 = sand.u32 %s72, 1
        %s150 = smul.addr %s149, 8
        %s151 = scalar_lea.vmem [#allocation5], %s150
        %p152 = scmp.lt.s32.totalorder %s17, 1
        %s153 = scalar_select %p152, %s17, 1
        %s154 = smul.addr %s153, 8
        %s155 = scalar_lea.vmem %s0, %s154
        %v156 = vld [vmem:[%s155] sm:$0xff]
        %v157 = vld [vmem:[#allocation2] sm:$0xff]
        %v158 = vld [vmem:[#allocation2 + $0x8] sm:$0xff]
        %v159 = vld [vmem:[#allocation2 + $0x10] sm:$0xff]
        %v160 = vld [vmem:[#allocation2 + $0x18] sm:$0xff]
        %v161 = vld [vmem:[#allocation2 + $0x20] sm:$0xff]
        %v162 = vld [vmem:[#allocation2 + $0x28] sm:$0xff]
        %v163 = vld [vmem:[#allocation2 + $0x30] sm:$0xff]
        %v164 = vld [vmem:[#allocation2 + $0x38] sm:$0xff]
        %v165 = vlaneseq
        %v166 = vand.u32 %v165, 127
        %167 = vset.pattern.permute.xlu0 0
        %168 = vperm.xlu0 %167, %v156
        %v169 = vpop.permute.xlu0 %168
        %vm170 = vcmp.eq.s32.totalorder %v169, %v166
        %v171 = vsel %vm170, 1, 0
        %v172 = vcvt.s32.f32 %v171
        %vm173 = vcmask 523264
        %v175 = vsel %vm173, %v172, 0
        %177 = vmatpush.msra.mxu0 0.0
        %178 = vmatpush.msra.mxu0 0.0
        %179 = vmatpush.msra.mxu0 0.0
        %180 = vmatpush.msra.mxu0 0.0
        %181 = vmatpush.msra.mxu0 0.0
        %182 = vmatpush.msra.mxu0 0.0
        %183 = vmatpush.msra.mxu0 0.0
        %184 = vmatpush.msra.mxu0 0.0
        %v185 = vand.u32 %v164, 4294901760
        %186 = vmatpush.msra.mxu0 %v185
        %v187 = vand.u32 %v163, 4294901760
        %188 = vmatpush.msra.mxu0 %v187
        %v189 = vand.u32 %v162, 4294901760
        %190 = vmatpush.msra.mxu0 %v189
        %v191 = vand.u32 %v161, 4294901760
        %192 = vmatpush.msra.mxu0 %v191
        %v193 = vand.u32 %v160, 4294901760
        %194 = vmatpush.msra.mxu0 %v193
        %v195 = vand.u32 %v159, 4294901760
        %196 = vmatpush.msra.mxu0 %v195
        %v197 = vand.u32 %v158, 4294901760
        %198 = vmatpush.msra.mxu0 %v197
        %v199 = vand.u32 %v157, 4294901760
        %200 = vmatpush.msra.mxu0 %v199
        %v201 = vand.u32 %v175, 4294901760
        %v202 = vsub.f32 %v175, %v201
        %v203 = vand.u32 %v202, 4294901760
        %v204 = vsub.f32 %v202, %v203
        %v205 = vand.u32 %v204, 4294901760
        %206 = vmatmul.f32.gmra.mxu0 %v205
        %v207 = vpop.f32.mrf.mxu0
        %v208 = vadd.f32 0.0, %v207
        %209 = vdwg.mxu0
        %210 = vmatpush.msra.mxu0 0.0
        %211 = vmatpush.msra.mxu0 0.0
        %212 = vmatpush.msra.mxu0 0.0
        %213 = vmatpush.msra.mxu0 0.0
        %214 = vmatpush.msra.mxu0 0.0
        %215 = vmatpush.msra.mxu0 0.0
        %216 = vmatpush.msra.mxu0 0.0
        %217 = vmatpush.msra.mxu0 0.0
        %v218 = vand.u32 %v164, 4294901760
        %v219 = vsub.f32 %v164, %v218
        %v220 = vand.u32 %v219, 4294901760
        %v221 = vsub.f32 %v219, %v220
        %v222 = vand.u32 %v221, 4294901760
        %223 = vmatpush.msra.mxu0 %v222
        %v224 = vand.u32 %v163, 4294901760
        %v225 = vsub.f32 %v163, %v224
        %v226 = vand.u32 %v225, 4294901760
        %v227 = vsub.f32 %v225, %v226
        %v228 = vand.u32 %v227, 4294901760
        %229 = vmatpush.msra.mxu0 %v228
        %v230 = vand.u32 %v162, 4294901760
        %v231 = vsub.f32 %v162, %v230
        %v232 = vand.u32 %v231, 4294901760
        %v233 = vsub.f32 %v231, %v232
        %v234 = vand.u32 %v233, 4294901760
        %235 = vmatpush.msra.mxu0 %v234
        %v236 = vand.u32 %v161, 4294901760
        %v237 = vsub.f32 %v161, %v236
        %v238 = vand.u32 %v237, 4294901760
        %v239 = vsub.f32 %v237, %v238
        %v240 = vand.u32 %v239, 4294901760
        %241 = vmatpush.msra.mxu0 %v240
        %v242 = vand.u32 %v160, 4294901760
        %v243 = vsub.f32 %v160, %v242
        %v244 = vand.u32 %v243, 4294901760
        %v245 = vsub.f32 %v243, %v244
        %v246 = vand.u32 %v245, 4294901760
        %247 = vmatpush.msra.mxu0 %v246
        %v248 = vand.u32 %v159, 4294901760
        %v249 = vsub.f32 %v159, %v248
        %v250 = vand.u32 %v249, 4294901760
        %v251 = vsub.f32 %v249, %v250
        %v252 = vand.u32 %v251, 4294901760
        %253 = vmatpush.msra.mxu0 %v252
        %v254 = vand.u32 %v158, 4294901760
        %v255 = vsub.f32 %v158, %v254
        %v256 = vand.u32 %v255, 4294901760
        %v257 = vsub.f32 %v255, %v256
        %v258 = vand.u32 %v257, 4294901760
        %259 = vmatpush.msra.mxu0 %v258
        %v260 = vand.u32 %v157, 4294901760
        %v261 = vsub.f32 %v157, %v260
        %v262 = vand.u32 %v261, 4294901760
        %v263 = vsub.f32 %v261, %v262
        %v264 = vand.u32 %v263, 4294901760
        %265 = vmatpush.msra.mxu0 %v264
        %v266 = vand.u32 %v175, 4294901760
        %267 = vmatmul.f32.gmra.mxu0 %v266
        %v268 = vpop.f32.mrf.mxu0
        %v269 = vadd.f32 %v208, %v268
        %270 = vdwg.mxu0
        %271 = vmatpush.msra.mxu0 0.0
        %272 = vmatpush.msra.mxu0 0.0
        %273 = vmatpush.msra.mxu0 0.0
        %274 = vmatpush.msra.mxu0 0.0
        %275 = vmatpush.msra.mxu0 0.0
        %276 = vmatpush.msra.mxu0 0.0
        %277 = vmatpush.msra.mxu0 0.0
        %278 = vmatpush.msra.mxu0 0.0
        %v279 = vand.u32 %v164, 4294901760
        %v280 = vsub.f32 %v164, %v279
        %281 = vmatpush.msra.mxu0 %v280
        %v282 = vand.u32 %v163, 4294901760
        %v283 = vsub.f32 %v163, %v282
        %284 = vmatpush.msra.mxu0 %v283
        %v285 = vand.u32 %v162, 4294901760
        %v286 = vsub.f32 %v162, %v285
        %287 = vmatpush.msra.mxu0 %v286
        %v288 = vand.u32 %v161, 4294901760
        %v289 = vsub.f32 %v161, %v288
        %290 = vmatpush.msra.mxu0 %v289
        %v291 = vand.u32 %v160, 4294901760
        %v292 = vsub.f32 %v160, %v291
        %293 = vmatpush.msra.mxu0 %v292
        %v294 = vand.u32 %v159, 4294901760
        %v295 = vsub.f32 %v159, %v294
        %296 = vmatpush.msra.mxu0 %v295
        %v297 = vand.u32 %v158, 4294901760
        %v298 = vsub.f32 %v158, %v297
        %299 = vmatpush.msra.mxu0 %v298
        %v300 = vand.u32 %v157, 4294901760
        %v301 = vsub.f32 %v157, %v300
        %302 = vmatpush.msra.mxu0 %v301
        %v303 = vand.u32 %v175, 4294901760
        %v304 = vsub.f32 %v175, %v303
        %305 = vmatmul.f32.gmra.mxu0 %v304
        %v306 = vpop.f32.mrf.mxu0
        %v307 = vadd.f32 %v269, %v306
        %308 = vdwg.mxu0
        %309 = vmatpush.msra.mxu0 0.0
        %310 = vmatpush.msra.mxu0 0.0
        %311 = vmatpush.msra.mxu0 0.0
        %312 = vmatpush.msra.mxu0 0.0
        %313 = vmatpush.msra.mxu0 0.0
        %314 = vmatpush.msra.mxu0 0.0
        %315 = vmatpush.msra.mxu0 0.0
        %316 = vmatpush.msra.mxu0 0.0
        %v317 = vand.u32 %v164, 4294901760
        %318 = vmatpush.msra.mxu0 %v317
        %v319 = vand.u32 %v163, 4294901760
        %320 = vmatpush.msra.mxu0 %v319
        %v321 = vand.u32 %v162, 4294901760
        %322 = vmatpush.msra.mxu0 %v321
        %v323 = vand.u32 %v161, 4294901760
        %324 = vmatpush.msra.mxu0 %v323
        %v325 = vand.u32 %v160, 4294901760
        %326 = vmatpush.msra.mxu0 %v325
        %v327 = vand.u32 %v159, 4294901760
        %328 = vmatpush.msra.mxu0 %v327
        %v329 = vand.u32 %v158, 4294901760
        %330 = vmatpush.msra.mxu0 %v329
        %v331 = vand.u32 %v157, 4294901760
        %332 = vmatpush.msra.mxu0 %v331
        %v333 = vand.u32 %v175, 4294901760
        %v334 = vsub.f32 %v175, %v333
        %v335 = vand.u32 %v334, 4294901760
        %336 = vmatmul.f32.gmra.mxu0 %v335
        %v337 = vpop.f32.mrf.mxu0
        %v338 = vadd.f32 %v307, %v337
        %339 = vdwg.mxu0
        %340 = vmatpush.msra.mxu0 0.0
        %341 = vmatpush.msra.mxu0 0.0
        %342 = vmatpush.msra.mxu0 0.0
        %343 = vmatpush.msra.mxu0 0.0
        %344 = vmatpush.msra.mxu0 0.0
        %345 = vmatpush.msra.mxu0 0.0
        %346 = vmatpush.msra.mxu0 0.0
        %347 = vmatpush.msra.mxu0 0.0
        %v348 = vand.u32 %v164, 4294901760
        %v349 = vsub.f32 %v164, %v348
        %v350 = vand.u32 %v349, 4294901760
        %351 = vmatpush.msra.mxu0 %v350
        %v352 = vand.u32 %v163, 4294901760
        %v353 = vsub.f32 %v163, %v352
        %v354 = vand.u32 %v353, 4294901760
        %355 = vmatpush.msra.mxu0 %v354
        %v356 = vand.u32 %v162, 4294901760
        %v357 = vsub.f32 %v162, %v356
        %v358 = vand.u32 %v357, 4294901760
        %359 = vmatpush.msra.mxu0 %v358
        %v360 = vand.u32 %v161, 4294901760
        %v361 = vsub.f32 %v161, %v360
        %v362 = vand.u32 %v361, 4294901760
        %363 = vmatpush.msra.mxu0 %v362
        %v364 = vand.u32 %v160, 4294901760
        %v365 = vsub.f32 %v160, %v364
        %v366 = vand.u32 %v365, 4294901760
        %367 = vmatpush.msra.mxu0 %v366
        %v368 = vand.u32 %v159, 4294901760
        %v369 = vsub.f32 %v159, %v368
        %v370 = vand.u32 %v369, 4294901760
        %371 = vmatpush.msra.mxu0 %v370
        %v372 = vand.u32 %v158, 4294901760
        %v373 = vsub.f32 %v158, %v372
        %v374 = vand.u32 %v373, 4294901760
        %375 = vmatpush.msra.mxu0 %v374
        %v376 = vand.u32 %v157, 4294901760
        %v377 = vsub.f32 %v157, %v376
        %v378 = vand.u32 %v377, 4294901760
        %379 = vmatpush.msra.mxu0 %v378
        %v380 = vand.u32 %v175, 4294901760
        %381 = vmatmul.f32.gmra.mxu0 %v380
        %v382 = vpop.f32.mrf.mxu0
        %v383 = vadd.f32 %v338, %v382
        %384 = vdwg.mxu0
        %385 = vmatpush.msra.mxu0 0.0
        %386 = vmatpush.msra.mxu0 0.0
        %387 = vmatpush.msra.mxu0 0.0
        %388 = vmatpush.msra.mxu0 0.0
        %389 = vmatpush.msra.mxu0 0.0
        %390 = vmatpush.msra.mxu0 0.0
        %391 = vmatpush.msra.mxu0 0.0
        %392 = vmatpush.msra.mxu0 0.0
        %v393 = vand.u32 %v164, 4294901760
        %394 = vmatpush.msra.mxu0 %v393
        %v395 = vand.u32 %v163, 4294901760
        %396 = vmatpush.msra.mxu0 %v395
        %v397 = vand.u32 %v162, 4294901760
        %398 = vmatpush.msra.mxu0 %v397
        %v399 = vand.u32 %v161, 4294901760
        %400 = vmatpush.msra.mxu0 %v399
        %v401 = vand.u32 %v160, 4294901760
        %402 = vmatpush.msra.mxu0 %v401
        %v403 = vand.u32 %v159, 4294901760
        %404 = vmatpush.msra.mxu0 %v403
        %v405 = vand.u32 %v158, 4294901760
        %406 = vmatpush.msra.mxu0 %v405
        %v407 = vand.u32 %v157, 4294901760
        %408 = vmatpush.msra.mxu0 %v407
        %v409 = vand.u32 %v175, 4294901760
        %410 = vmatmul.f32.gmra.mxu0 %v409
        %v411 = vpop.f32.mrf.mxu0
        %v412 = vadd.f32 %v383, %v411
        %413 = vdwg.mxu0
        %v414 = vmul.f32 %v412, %v412
        %415 = vadd.xlane.f32.xlu0 %v414
        %v416 = vpop.xlane.xlu0 %415
        %v417 = vmax.f32 %v416, 1e-24
        %v418 = vrsqrt.pop %v417
        %v419 = vmul.f32 %v418, %v417
        %v420 = vmul.f32 %v419, %v418
        %v421 = vmul.f32 0.5, %v420
        %v422 = vsub.f32 1.5, %v421
        %v423 = vmul.f32 %v418, %v422
        %vm424 = vweird.f32 %v417
        %vm425 = vweird.f32 %v418
        %vm426 = vmor %vm424, %vm425
        %v427 = vsel %vm426, %v418, %v423
        %v428 = vmul.f32 %v412, %v427
        %429 = vst [vmem:[%s151] sm:$0xff] %v428
        %s430 = sand.u32 %s72, 1
        %s431 = scalar_lea.sflag [#allocation4], %s430
        %s432 = sand.u32 %s72, 1
        %s433 = smul.addr %s432, 8
        %s434 = scalar_lea.vmem [#allocation5], %s433
        // Predicated region
        $region33: #{tpu_custom_call.1} parent=27 // pred_check
          %p435 = pneg %p82
        $region34: #{tpu_custom_call.1} parent=27 // pred_check_branch
          %437 = sbr.rel (%p435) target = $region36
        $region35: #{tpu_custom_call.1} parent=27 // pred_region
          %439 = vsyncadd %s431, 0
          %s440 = smul.addr %s17, 8
          %s441 = scalar_lea.hbm %s2, %s440
          %s443 = sshll.u32 %s434, 4
          %s444 = int_to_ptr.vmem [resolvable:$true] %s443
          %s445 = sshll.u32 %s441, 4
          %s446 = int_to_ptr.hbm [resolvable:$true] %s445
          %448 = dma.vmem_to_hbm [thread:$0]  %s444, 128, %s446, %s431
        $region36: #{tpu_custom_call.1} parent=27 // pred_fallthru
          _
      $region28: #{tpu_custom_call.1} parent=5 // pred_fallthru
        _
      %p449 = scmp.le.s32.totalorder 2, %s12
      // Predicated region
      $region37: #{tpu_custom_call.1} parent=5 // pred_check
        %p450 = pneg %p449
      $region38: #{tpu_custom_call.1} parent=5 // pred_check_branch
        %452 = sbr.rel (%p450) target = $region40
      $region39: #{tpu_custom_call.1} parent=5 // pred_region
        %s453 = ssub.s32 %s12, 2
        // Predicated region
        $region41: #{tpu_custom_call.1} parent=39 // pred_check
          %p454 = pneg %p88
        $region42: #{tpu_custom_call.1} parent=39 // pred_check_branch
          %456 = sbr.rel (%p454) target = $region44
        $region43: #{tpu_custom_call.1} parent=39 // pred_region
          %s457 = sand.u32 %s73, 1
          %s458 = scalar_lea.sflag [#allocation4], %s457
          %s459 = sand.u32 %s73, 1
          %s460 = smul.addr %s459, 8
          %s461 = scalar_lea.vmem [#allocation5], %s460
          %463 = dma.done %s458, 128
        $region44: #{tpu_custom_call.1} parent=39 // pred_fallthru
          _
      $region40: #{tpu_custom_call.1} parent=5 // pred_fallthru
        _
    $region6: #{tpu_custom_call.1} parent=1 // loop_footer
      %s16 = sadd.s32 1, %s12
    $region7: #{tpu_custom_call.1} parent=1 // loop_footer_branch
      %11 = sbr.rel target = $region3
    $region8: #{tpu_custom_call.1} parent=1 // loop_exit
      _
    %464 = vsyncpa [#allocation3], 1
    %s465 = scalar_lea.sflag [#allocation3], 1
    %466 = vsyncpa %s465, 1
    %467 = vsyncpa [#allocation4], 1
    %s468 = scalar_lea.sflag [#allocation4], 1
    %469 = vsyncpa %s468, 1

</llo_original>
